<compile_context>
chip_gen: v7x
topology: tpu7x:2x2x1
jax: 0.10.0
libtpu: 0.0.40
codegen_flags: <defaults>
</compile_context>

<pallas_src>
import functools

import jax
import jax.numpy as jnp
import numpy as np
from jax.experimental import pallas as pl
from jax.experimental.pallas import tpu as pltpu

EPS = 1e-5  # torch.nn.InstanceNorm2d default


# ---------------------------------------------------------------------------
# Fused kernel: Nb samples per grid step, everything lane-dense (C, H*W)
# ---------------------------------------------------------------------------
def _resnet_block_kernel(x_ref, w1_ref, w2_ref, o_ref,
                         *, H, W, C, d, Nb, mxu_dtype):
    HW = H * W
    # Column index of every flattened spatial position (shared by both convs).
    col = jax.lax.broadcasted_iota(jnp.int32, (C, HW), 1) % W

    def instance_norm(v):
        # Per-channel stats over H*W (lane reduce); centered two-pass variance.
        mean = jnp.mean(v, axis=1, keepdims=True)
        cen = v - mean
        var = jnp.mean(cen * cen, axis=1, keepdims=True)
        return cen * jax.lax.rsqrt(var + EPS)

    def conv3x3(v, w, dd):
        # v: (C, HW) f32 value, w: (C, 9C) mxu_dtype value.
        # Row reflection by concatenating row slices of the flat tile; a dd-wide
        # zero guard on each end keeps the +/-dd tap shifts in bounds (guarded
        # elements only land on positions the column fixup overwrites).
        guard = jnp.zeros((C, dd), dtype=v.dtype)
        top = [v[:, (dd - r) * W:(dd - r + 1) * W] for r in range(dd)]      # rows dd..1
        bot = [v[:, (H - 2 - m) * W:(H - 1 - m) * W] for m in range(dd)]    # rows H-2..H-1-dd
        xe = jnp.concatenate([guard] + top + [v] + bot + [guard], axis=1)

        slabs = []
        for kh in range(3):
            base = dd + kh * dd * W
            raw = [xe[:, base + (kw - 1) * dd: base + (kw - 1) * dd + HW]
                   for kw in range(3)]
            left, mid, right = raw
            # Column reflection: fix the dd boundary columns of the +/-dd taps
            # using other raw taps of the same kernel row (static for d in {1,2}).
            if dd == 1:
                left = jnp.where(col == 0, raw[2], left)
                right = jnp.where(col == W - 1, raw[0], right)
            else:  # dd == 2
                left = jnp.where(col == 0, raw[2],
                                 jnp.where(col == 1, raw[1], left))
                right = jnp.where(col == W - 1, raw[0],
                                  jnp.where(col == W - 2, raw[1], right))
            slabs += [left, mid, right]

        rhs = jnp.concatenate(slabs, axis=0).astype(mxu_dtype)       # (9C, HW)
        return jnp.dot(w, rhs, preferred_element_type=jnp.float32)   # (C, HW) f32

    w1 = w1_ref[...]
    w2 = w2_ref[...]
    for s in range(Nb):                       # static unroll over samples in block
        xs = x_ref[s]                         # (C, HW) f32, lane-dense
        h = conv3x3(xs, w1, d)                # dilated conv1
        h = jnp.maximum(instance_norm(h), 0.0)
        h = conv3x3(h, w2, 1)                 # conv2
        o_ref[s] = xs + instance_norm(h)      # residual, lane-dense store


# ---------------------------------------------------------------------------
# Wrapper
# ---------------------------------------------------------------------------
def _derived_vmem_limit(nb, c, hw, mxu_itemsize):
    f32 = 4
    io = 2 * 2 * nb * c * hw * f32            # x & out blocks, double-buffered
    wts = 2 * 2 * c * 9 * c * mxu_itemsize    # w1 & w2, double-buffered
    work = 48 * nb * c * hw * f32             # headroom for in-kernel temporaries
    return int(min(120 * 1024 * 1024, max(8 * 1024 * 1024, io + wts + work)))


@functools.partial(jax.jit,
                   static_argnames=("dilation", "mxu_dtype", "samples_per_block"))
def resnet_block(x, w1, w2, *, dilation=1, mxu_dtype=jnp.bfloat16,
                 samples_per_block=1):
    """x: (N, C, H, W) f32; w1, w2: (C, C, 3, 3) (bias-free convs)."""
    N, C, H, W = x.shape
    d = dilation
    assert d in (1, 2), "kernel implements dilation 1 or 2"
    assert H > d and W > d
    assert N % samples_per_block == 0
    Nb = samples_per_block
    HW = H * W

    xf = x.astype(jnp.float32).reshape(N, C, HW)               # free layout reshape
    # OIHW -> (O, kh, kw, I) -> (O, 9*I): matches in-kernel tap stacking order.
    w1m = w1.transpose(0, 2, 3, 1).reshape(C, 9 * C).astype(mxu_dtype)
    w2m = w2.transpose(0, 2, 3, 1).reshape(C, 9 * C).astype(mxu_dtype)

    kernel = functools.partial(_resnet_block_kernel, H=H, W=W, C=C, d=d,
                               Nb=Nb, mxu_dtype=mxu_dtype)

    out = pl.pallas_call(
        kernel,
        out_shape=jax.ShapeDtypeStruct((N, C, HW), jnp.float32),
        grid_spec=pltpu.PrefetchScalarGridSpec(
            num_scalar_prefetch=0,
            grid=(N // Nb,),
            in_specs=[
                pl.BlockSpec((Nb, C, HW), lambda n: (n, 0, 0)),
                pl.BlockSpec((C, 9 * C), lambda n: (0, 0)),    # fetched once
                pl.BlockSpec((C, 9 * C), lambda n: (0, 0)),    # fetched once
            ],
            out_specs=pl.BlockSpec((Nb, C, HW), lambda n: (n, 0, 0)),
        ),
        compiler_params=pltpu.CompilerParams(
            dimension_semantics=("parallel",),
            vmem_limit_bytes=_derived_vmem_limit(
                Nb, C, HW, jnp.dtype(mxu_dtype).itemsize)),
    )(xf, w1m, w2m)
    return out.reshape(N, C, H, W)


# ---------------------------------------------------------------------------
# Pure-JAX reference (matches the PyTorch module forward semantics)
# ---------------------------------------------------------------------------
@functools.partial(jax.jit, static_argnames=("dilation", "conv_dtype"))
def reference(x, w1, w2, *, dilation=1, conv_dtype=jnp.float32):
    d = dilation

    def inorm(y):
        m = y.mean(axis=(2, 3), keepdims=True)
        v = ((y - m) ** 2).mean(axis=(2, 3), keepdims=True)
        return (y - m) * jax.lax.rsqrt(v + EPS)

    def conv(h, w, dil):
        return jax.lax.conv_general_dilated(
            h.astype(conv_dtype), w.astype(conv_dtype),
            window_strides=(1, 1), padding="VALID", rhs_dilation=(dil, dil),
            dimension_numbers=("NCHW", "OIHW", "NCHW"),
            preferred_element_type=jnp.float32)

    h = jnp.pad(x, ((0, 0), (0, 0), (d, d), (d, d)), mode="reflect")
    h = jnp.maximum(inorm(conv(h, w1, d)), 0.0)
    h = jnp.pad(h, ((0, 0), (0, 0), (1, 1), (1, 1)), mode="reflect")
    h = inorm(conv(h, w2, 1))
    return x + h


if __name__ == "__main__":
    # ResnetBlock(dim=8); small shapes: batch=2, channels=8, spatial=16x16.
    N, dim, H, W = 2, 8, 16, 16

    key = jax.random.PRNGKey(0)
    kx, k1, k2 = jax.random.split(key, 3)
    x = jax.random.normal(kx, (N, dim, H, W), dtype=jnp.float32)
    w1 = 0.2 * jax.random.normal(k1, (dim, dim, 3, 3), dtype=jnp.float32)
    w2 = 0.2 * jax.random.normal(k2, (dim, dim, 3, 3), dtype=jnp.float32)

    for dil in (1, 2):  # default dilation and the dilated variant
        out = jax.block_until_ready(resnet_block(x, w1, w2, dilation=dil))
        assert out.shape == (N, dim, H, W)

        # End-to-end check vs exact f32 module semantics (bound = bf16 operand
        # quantization of the two convs).
        ref_f32 = jax.block_until_ready(reference(x, w1, w2, dilation=dil))
        np.testing.assert_allclose(np.asarray(out), np.asarray(ref_f32),
                                   rtol=5e-2, atol=5e-2)

        # Tight structural check vs a reference whose convs use the same bf16
        # operands (validates reflection pad / im2col / norm / residual exactly).
        ref_bf = jax.block_until_ready(
            reference(x, w1, w2, dilation=dil, conv_dtype=jnp.bfloat16))
        np.testing.assert_allclose(np.asarray(out), np.asarray(ref_bf),
                                   rtol=2e-3, atol=2e-3)

    print("KERNEL_OK")
</pallas_src>

<mosaic_0001>
module attributes {stable_mosaic.version = 11 : i64} {
  func.func @_resnet_block_kernel(%arg0: i32, %arg1: memref<1x8x256xf32, #tpu.memory_space<vmem>>, %arg2: memref<8x72xbf16, #tpu.memory_space<vmem>>, %arg3: memref<8x72xbf16, #tpu.memory_space<vmem>>, %arg4: memref<1x8x256xf32, #tpu.memory_space<vmem>>) attributes {dimension_semantics = [#tpu.dimension_semantics<parallel>], iteration_bounds = array<i64: 2>, scalar_prefetch = 0 : i64, scratch_operands = 0 : i64, tpu.core_type = #tpu.core_type<tc>, window_params = [{transform_indices = @transform_0, window_bounds = array<i64: 1, 8, 256>}, {pipeline_mode = #tpu.pipeline_mode<synchronous>, transform_indices = @transform_1, window_bounds = array<i64: 8, 72>}, {pipeline_mode = #tpu.pipeline_mode<synchronous>, transform_indices = @transform_2, window_bounds = array<i64: 8, 72>}, {transform_indices = @transform_3, window_bounds = array<i64: 1, 8, 256>}]} {
    %0 = tpu.iota {dimensions = array<i32: 1>} : vector<8x256xi32>
    %c16_i32 = arith.constant 16 : i32
    %c0_i32 = arith.constant 0 : i32
    %1 = arith.cmpi eq, %c16_i32, %c0_i32 : i32
    %c1_i32 = arith.constant 1 : i32
    %2 = arith.select %1, %c1_i32, %c16_i32 : i32
    %3 = vector.broadcast %2 : i32 to vector<8x256xi32>
    %4 = arith.remsi %0, %3 : vector<8x256xi32>
    %c0_i32_0 = arith.constant 0 : i32
    %5 = vector.broadcast %c0_i32_0 : i32 to vector<8x256xi32>
    %6 = arith.cmpi ne, %4, %5 : vector<8x256xi32>
    %c0_i32_1 = arith.constant 0 : i32
    %7 = vector.broadcast %c0_i32_1 : i32 to vector<8x256xi32>
    %8 = arith.cmpi slt, %4, %7 : vector<8x256xi32>
    %c0_i32_2 = arith.constant 0 : i32
    %9 = arith.cmpi slt, %2, %c0_i32_2 : i32
    %10 = vector.broadcast %9 : i1 to vector<8x256xi1>
    %11 = vector.broadcast %10 : vector<8x256xi1> to vector<8x256xi1>
    %12 = arith.xori %8, %11 : vector<8x256xi1>
    %13 = arith.andi %12, %6 : vector<8x256xi1>
    %14 = vector.broadcast %2 : i32 to vector<8x256xi32>
    %15 = arith.addi %4, %14 : vector<8x256xi32>
    %16 = arith.select %13, %15, %4 : vector<8x256xi1>, vector<8x256xi32>
    %c0 = arith.constant 0 : index
    %c0_3 = arith.constant 0 : index
    %17 = vector.load %arg2[%c0, %c0_3] : memref<8x72xbf16, #tpu.memory_space<vmem>>, vector<8x72xbf16>
    %c0_4 = arith.constant 0 : index
    %c0_5 = arith.constant 0 : index
    %18 = vector.load %arg3[%c0_4, %c0_5] : memref<8x72xbf16, #tpu.memory_space<vmem>>, vector<8x72xbf16>
    %c0_6 = arith.constant 0 : index
    %c0_7 = arith.constant 0 : index
    %c0_8 = arith.constant 0 : index
    %19 = vector.load %arg1[%c0_6, %c0_7, %c0_8] : memref<1x8x256xf32, #tpu.memory_space<vmem>>, vector<1x8x256xf32>
    %20 = vector.shape_cast %19 : vector<1x8x256xf32> to vector<8x256xf32>
    %cst = arith.constant 0.000000e+00 : f32
    %21 = vector.broadcast %cst : f32 to vector<8x1xf32>
    %22 = vector.extract_strided_slice %20 {offsets = [0, 16], sizes = [8, 16], strides = [1, 1]} : vector<8x256xf32> to vector<8x16xf32>
    %23 = vector.extract_strided_slice %20 {offsets = [0, 224], sizes = [8, 16], strides = [1, 1]} : vector<8x256xf32> to vector<8x16xf32>
    %24 = tpu.concatenate %21, %22, %20, %23, %21 in 1 : vector<8x1xf32>, vector<8x16xf32>, vector<8x256xf32>, vector<8x16xf32>, vector<8x1xf32> -> vector<8x290xf32>
    %25 = vector.extract_strided_slice %24 {offsets = [0, 0], sizes = [8, 256], strides = [1, 1]} : vector<8x290xf32> to vector<8x256xf32>
    %26 = vector.extract_strided_slice %24 {offsets = [0, 1], sizes = [8, 256], strides = [1, 1]} : vector<8x290xf32> to vector<8x256xf32>
    %27 = vector.extract_strided_slice %24 {offsets = [0, 2], sizes = [8, 256], strides = [1, 1]} : vector<8x290xf32> to vector<8x256xf32>
    %c0_i32_9 = arith.constant 0 : i32
    %28 = vector.broadcast %c0_i32_9 : i32 to vector<8x256xi32>
    %29 = arith.cmpi eq, %16, %28 : vector<8x256xi32>
    %30 = arith.select %29, %27, %25 : vector<8x256xi1>, vector<8x256xf32>
    %c15_i32 = arith.constant 15 : i32
    %31 = vector.broadcast %c15_i32 : i32 to vector<8x256xi32>
    %32 = arith.cmpi eq, %16, %31 : vector<8x256xi32>
    %33 = arith.select %32, %25, %27 : vector<8x256xi1>, vector<8x256xf32>
    %34 = vector.extract_strided_slice %24 {offsets = [0, 16], sizes = [8, 256], strides = [1, 1]} : vector<8x290xf32> to vector<8x256xf32>
    %35 = vector.extract_strided_slice %24 {offsets = [0, 17], sizes = [8, 256], strides = [1, 1]} : vector<8x290xf32> to vector<8x256xf32>
    %36 = vector.extract_strided_slice %24 {offsets = [0, 18], sizes = [8, 256], strides = [1, 1]} : vector<8x290xf32> to vector<8x256xf32>
    %c0_i32_10 = arith.constant 0 : i32
    %37 = vector.broadcast %c0_i32_10 : i32 to vector<8x256xi32>
    %38 = arith.cmpi eq, %16, %37 : vector<8x256xi32>
    %39 = arith.select %38, %36, %34 : vector<8x256xi1>, vector<8x256xf32>
    %c15_i32_11 = arith.constant 15 : i32
    %40 = vector.broadcast %c15_i32_11 : i32 to vector<8x256xi32>
    %41 = arith.cmpi eq, %16, %40 : vector<8x256xi32>
    %42 = arith.select %41, %34, %36 : vector<8x256xi1>, vector<8x256xf32>
    %43 = vector.extract_strided_slice %24 {offsets = [0, 32], sizes = [8, 256], strides = [1, 1]} : vector<8x290xf32> to vector<8x256xf32>
    %44 = vector.extract_strided_slice %24 {offsets = [0, 33], sizes = [8, 256], strides = [1, 1]} : vector<8x290xf32> to vector<8x256xf32>
    %45 = vector.extract_strided_slice %24 {offsets = [0, 34], sizes = [8, 256], strides = [1, 1]} : vector<8x290xf32> to vector<8x256xf32>
    %c0_i32_12 = arith.constant 0 : i32
    %46 = vector.broadcast %c0_i32_12 : i32 to vector<8x256xi32>
    %47 = arith.cmpi eq, %16, %46 : vector<8x256xi32>
    %48 = arith.select %47, %45, %43 : vector<8x256xi1>, vector<8x256xf32>
    %c15_i32_13 = arith.constant 15 : i32
    %49 = vector.broadcast %c15_i32_13 : i32 to vector<8x256xi32>
    %50 = arith.cmpi eq, %16, %49 : vector<8x256xi32>
    %51 = arith.select %50, %43, %45 : vector<8x256xi1>, vector<8x256xf32>
    %52 = tpu.concatenate %30, %26, %33, %39, %35, %42, %48, %44, %51 in 0 : vector<8x256xf32>, vector<8x256xf32>, vector<8x256xf32>, vector<8x256xf32>, vector<8x256xf32>, vector<8x256xf32>, vector<8x256xf32>, vector<8x256xf32>, vector<8x256xf32> -> vector<72x256xf32>
    %53 = arith.truncf %52 : vector<72x256xf32> to vector<72x256xbf16>
    %cst_14 = arith.constant dense<0.000000e+00> : vector<8x256xf32>
    %54 = tpu.matmul %17, %53, %cst_14 {dimension_numbers = #tpu.dot_dimension_numbers<[1], [0], [0], [1], [0, 0, 1, 1], [], []>} : vector<8x72xbf16>, vector<72x256xbf16>, vector<8x256xf32> -> vector<8x256xf32>
    %cst_15 = arith.constant dense<0.000000e+00> : vector<8xf32>
    %55 = vector.multi_reduction <add>, %54, %cst_15 [1] : vector<8x256xf32> to vector<8xf32>
    %56 = vector.shape_cast %55 : vector<8xf32> to vector<8x1xf32>
    %cst_16 = arith.constant 2.560000e+02 : f32
    %57 = vector.broadcast %cst_16 : f32 to vector<8x1xf32>
    %58 = arith.divf %56, %57 : vector<8x1xf32>
    %59 = vector.broadcast %58 : vector<8x1xf32> to vector<8x256xf32>
    %60 = arith.subf %54, %59 : vector<8x256xf32>
    %61 = arith.mulf %60, %60 : vector<8x256xf32>
    %cst_17 = arith.constant dense<0.000000e+00> : vector<8xf32>
    %62 = vector.multi_reduction <add>, %61, %cst_17 [1] : vector<8x256xf32> to vector<8xf32>
    %63 = vector.shape_cast %62 : vector<8xf32> to vector<8x1xf32>
    %cst_18 = arith.constant 2.560000e+02 : f32
    %64 = vector.broadcast %cst_18 : f32 to vector<8x1xf32>
    %65 = arith.divf %63, %64 : vector<8x1xf32>
    %cst_19 = arith.constant 9.99999974E-6 : f32
    %66 = vector.broadcast %cst_19 : f32 to vector<8x1xf32>
    %67 = arith.addf %65, %66 : vector<8x1xf32>
    %68 = math.rsqrt %67 : vector<8x1xf32>
    %69 = vector.broadcast %68 : vector<8x1xf32> to vector<8x256xf32>
    %70 = arith.mulf %60, %69 : vector<8x256xf32>
    %cst_20 = arith.constant 0.000000e+00 : f32
    %71 = vector.broadcast %cst_20 : f32 to vector<8x256xf32>
    %72 = arith.maximumf %70, %71 : vector<8x256xf32>
    %cst_21 = arith.constant 0.000000e+00 : f32
    %73 = vector.broadcast %cst_21 : f32 to vector<8x1xf32>
    %74 = vector.extract_strided_slice %72 {offsets = [0, 16], sizes = [8, 16], strides = [1, 1]} : vector<8x256xf32> to vector<8x16xf32>
    %75 = vector.extract_strided_slice %72 {offsets = [0, 224], sizes = [8, 16], strides = [1, 1]} : vector<8x256xf32> to vector<8x16xf32>
    %76 = tpu.concatenate %73, %74, %72, %75, %73 in 1 : vector<8x1xf32>, vector<8x16xf32>, vector<8x256xf32>, vector<8x16xf32>, vector<8x1xf32> -> vector<8x290xf32>
    %77 = vector.extract_strided_slice %76 {offsets = [0, 0], sizes = [8, 256], strides = [1, 1]} : vector<8x290xf32> to vector<8x256xf32>
    %78 = vector.extract_strided_slice %76 {offsets = [0, 1], sizes = [8, 256], strides = [1, 1]} : vector<8x290xf32> to vector<8x256xf32>
    %79 = vector.extract_strided_slice %76 {offsets = [0, 2], sizes = [8, 256], strides = [1, 1]} : vector<8x290xf32> to vector<8x256xf32>
    %c0_i32_22 = arith.constant 0 : i32
    %80 = vector.broadcast %c0_i32_22 : i32 to vector<8x256xi32>
    %81 = arith.cmpi eq, %16, %80 : vector<8x256xi32>
    %82 = arith.select %81, %79, %77 : vector<8x256xi1>, vector<8x256xf32>
    %c15_i32_23 = arith.constant 15 : i32
    %83 = vector.broadcast %c15_i32_23 : i32 to vector<8x256xi32>
    %84 = arith.cmpi eq, %16, %83 : vector<8x256xi32>
    %85 = arith.select %84, %77, %79 : vector<8x256xi1>, vector<8x256xf32>
    %86 = vector.extract_strided_slice %76 {offsets = [0, 16], sizes = [8, 256], strides = [1, 1]} : vector<8x290xf32> to vector<8x256xf32>
    %87 = vector.extract_strided_slice %76 {offsets = [0, 17], sizes = [8, 256], strides = [1, 1]} : vector<8x290xf32> to vector<8x256xf32>
    %88 = vector.extract_strided_slice %76 {offsets = [0, 18], sizes = [8, 256], strides = [1, 1]} : vector<8x290xf32> to vector<8x256xf32>
    %c0_i32_24 = arith.constant 0 : i32
    %89 = vector.broadcast %c0_i32_24 : i32 to vector<8x256xi32>
    %90 = arith.cmpi eq, %16, %89 : vector<8x256xi32>
    %91 = arith.select %90, %88, %86 : vector<8x256xi1>, vector<8x256xf32>
    %c15_i32_25 = arith.constant 15 : i32
    %92 = vector.broadcast %c15_i32_25 : i32 to vector<8x256xi32>
    %93 = arith.cmpi eq, %16, %92 : vector<8x256xi32>
    %94 = arith.select %93, %86, %88 : vector<8x256xi1>, vector<8x256xf32>
    %95 = vector.extract_strided_slice %76 {offsets = [0, 32], sizes = [8, 256], strides = [1, 1]} : vector<8x290xf32> to vector<8x256xf32>
    %96 = vector.extract_strided_slice %76 {offsets = [0, 33], sizes = [8, 256], strides = [1, 1]} : vector<8x290xf32> to vector<8x256xf32>
    %97 = vector.extract_strided_slice %76 {offsets = [0, 34], sizes = [8, 256], strides = [1, 1]} : vector<8x290xf32> to vector<8x256xf32>
    %c0_i32_26 = arith.constant 0 : i32
    %98 = vector.broadcast %c0_i32_26 : i32 to vector<8x256xi32>
    %99 = arith.cmpi eq, %16, %98 : vector<8x256xi32>
    %100 = arith.select %99, %97, %95 : vector<8x256xi1>, vector<8x256xf32>
    %c15_i32_27 = arith.constant 15 : i32
    %101 = vector.broadcast %c15_i32_27 : i32 to vector<8x256xi32>
    %102 = arith.cmpi eq, %16, %101 : vector<8x256xi32>
    %103 = arith.select %102, %95, %97 : vector<8x256xi1>, vector<8x256xf32>
    %104 = tpu.concatenate %82, %78, %85, %91, %87, %94, %100, %96, %103 in 0 : vector<8x256xf32>, vector<8x256xf32>, vector<8x256xf32>, vector<8x256xf32>, vector<8x256xf32>, vector<8x256xf32>, vector<8x256xf32>, vector<8x256xf32>, vector<8x256xf32> -> vector<72x256xf32>
    %105 = arith.truncf %104 : vector<72x256xf32> to vector<72x256xbf16>
    %cst_28 = arith.constant dense<0.000000e+00> : vector<8x256xf32>
    %106 = tpu.matmul %18, %105, %cst_28 {dimension_numbers = #tpu.dot_dimension_numbers<[1], [0], [0], [1], [0, 0, 1, 1], [], []>} : vector<8x72xbf16>, vector<72x256xbf16>, vector<8x256xf32> -> vector<8x256xf32>
    %cst_29 = arith.constant dense<0.000000e+00> : vector<8xf32>
    %107 = vector.multi_reduction <add>, %106, %cst_29 [1] : vector<8x256xf32> to vector<8xf32>
    %108 = vector.shape_cast %107 : vector<8xf32> to vector<8x1xf32>
    %cst_30 = arith.constant 2.560000e+02 : f32
    %109 = vector.broadcast %cst_30 : f32 to vector<8x1xf32>
    %110 = arith.divf %108, %109 : vector<8x1xf32>
    %111 = vector.broadcast %110 : vector<8x1xf32> to vector<8x256xf32>
    %112 = arith.subf %106, %111 : vector<8x256xf32>
    %113 = arith.mulf %112, %112 : vector<8x256xf32>
    %cst_31 = arith.constant dense<0.000000e+00> : vector<8xf32>
    %114 = vector.multi_reduction <add>, %113, %cst_31 [1] : vector<8x256xf32> to vector<8xf32>
    %115 = vector.shape_cast %114 : vector<8xf32> to vector<8x1xf32>
    %cst_32 = arith.constant 2.560000e+02 : f32
    %116 = vector.broadcast %cst_32 : f32 to vector<8x1xf32>
    %117 = arith.divf %115, %116 : vector<8x1xf32>
    %cst_33 = arith.constant 9.99999974E-6 : f32
    %118 = vector.broadcast %cst_33 : f32 to vector<8x1xf32>
    %119 = arith.addf %117, %118 : vector<8x1xf32>
    %120 = math.rsqrt %119 : vector<8x1xf32>
    %121 = vector.broadcast %120 : vector<8x1xf32> to vector<8x256xf32>
    %122 = arith.mulf %112, %121 : vector<8x256xf32>
    %123 = arith.addf %20, %122 : vector<8x256xf32>
    %c0_34 = arith.constant 0 : index
    %c0_35 = arith.constant 0 : index
    %c0_36 = arith.constant 0 : index
    %124 = vector.load %arg4[%c0_34, %c0_35, %c0_36] : memref<1x8x256xf32, #tpu.memory_space<vmem>>, vector<1x8x256xf32>
    %125 = vector.shape_cast %124 : vector<1x8x256xf32> to vector<8x256xf32>
    %126 = vector.shape_cast %123 : vector<8x256xf32> to vector<1x8x256xf32>
    tpu.vector_store %arg4[%c0_34, %c0_35, %c0_36], %126 {strides = array<i32>} : memref<1x8x256xf32, #tpu.memory_space<vmem>>, vector<1x8x256xf32>,
    return
  }
  func.func @transform_0(%arg0: i32) -> (i32, i32, i32) {
    %c0_i32 = arith.constant 0 : i32
    %c0_i32_0 = arith.constant 0 : i32
    %c0_i32_1 = arith.constant 0 : i32
    return %arg0, %c0_i32, %c0_i32_0 : i32, i32, i32
  }
  func.func @transform_1(%arg0: i32) -> (i32, i32) {
    %c0_i32 = arith.constant 0 : i32
    %c0_i32_0 = arith.constant 0 : i32
    %c0_i32_1 = arith.constant 0 : i32
    return %c0_i32, %c0_i32_0 : i32, i32
  }
  func.func @transform_2(%arg0: i32) -> (i32, i32) {
    %c0_i32 = arith.constant 0 : i32
    %c0_i32_0 = arith.constant 0 : i32
    %c0_i32_1 = arith.constant 0 : i32
    return %c0_i32, %c0_i32_0 : i32, i32
  }
  func.func @transform_3(%arg0: i32) -> (i32, i32, i32) {
    %c0_i32 = arith.constant 0 : i32
    %c0_i32_0 = arith.constant 0 : i32
    %c0_i32_1 = arith.constant 0 : i32
    return %arg0, %c0_i32, %c0_i32_0 : i32, i32, i32
  }
}

</mosaic_0001>

<llo_original>
// kernel: resnet_block.1
$region0: #{resnet_block.1}
  #allocation0 [shape = 'u32[]', space=smem, size = 0x4, offset = 0x4, fixed_abs, tag = 'smem constant byte address 0x4 - core index']
  #allocation1 [shape = 'u32[144,128]{1,0:T(1,128)}', space=vmem, size = 0x12000, scoped, tag = 'internal scratch']
  %s0 = inlined_call_operand.vmem [shape: f32[2,8,256], index: 0, kind: input, shape index: {}]
  %s1 = inlined_call_operand.vmem [shape: bf16[8,72], index: 1, kind: input, shape index: {}]
  %s2 = inlined_call_operand.vmem [shape: bf16[8,72], index: 2, kind: input, shape index: {}]
  %s3 = inlined_call_operand.vmem [shape: f32[2,8,256], index: 3, kind: output, shape index: {}]
  %s4 = sld [smem:[#allocation0]]
  $region45: #{resnet_block.1} parent=0
    _
  %s6 = ssub.s32 1, %s4
  %s7 = scalar_select 0, %s6, %s4
  loop: start=0, step=1, limit=4
  $region2: #{resnet_block.1} parent=0 // loop_pre_header
    _
  $region3: #{resnet_block.1} parent=0 // loop_header
    %s9 = sphi 0, %s13
    %p10 = scmp.ge.s32.totalorder %s9, 4
    %s19 = sphi 0, %s21
    %s22 = sphi 0, %s19
    %s23 = sphi 0, %s22
    %s39 = sphi 0, %s23
    %s43 = sphi 0, %s43
    %s45 = sphi 0, %s43
    %s46 = sphi 0, %s45
    %s60 = sphi 0, %s46
    %s64 = sphi 0, %s64
    %s66 = sphi 0, %s64
    %s67 = sphi 0, %s66
    %s81 = sphi 0, %s67
    %s87 = sphi 0, %s89
    %s90 = sphi 0, %s87
    %s91 = sphi 0, %s90
    %s107 = sphi 0, %s91
  $region4: #{resnet_block.1} parent=0 // loop_header_branch
    %12 = sbr.rel (%p10) target = $region8
  $region5: #{resnet_block.1} parent=0 // loop_body
    %s14 = ssub.s32 %s9, 1
    %s15 = ssub.s32 %s9, 2
    %s16 = sadd.s32 %s9, 1
    %s17 = ssub.s32 %s9, %s16
    %p18 = scmp.eq.s32.totalorder %s17, 0
    %s20 = sadd.s32 %s19, 1
    %s21 = scalar_select %p18, %s19, %s20
    %p24 = pneg %p18
    %p25 = scmp.eq.s32.totalorder %s9, 1
    %p26 = por %p24, %p25
    %p27 = scmp.ne.s32.totalorder %s19, %s22
    %p28 = scmp.eq.s32.totalorder %s9, 0
    %p29 = por %p27, %p28
    %p30 = scmp.ne.s32.totalorder %s19, %s22
    %p31 = scmp.eq.s32.totalorder %s14, 1
    %p32 = por %p30, %p31
    %p33 = scmp.ne.s32.totalorder %s22, %s23
    %p34 = scmp.eq.s32.totalorder %s14, 0
    %p35 = por %p33, %p34
    %p36 = scmp.ne.s32.totalorder %s22, %s23
    %p37 = scmp.eq.s32.totalorder %s15, 1
    %p38 = por %p36, %p37
    %p40 = scmp.ne.s32.totalorder %s23, %s39
    %p41 = scmp.eq.s32.totalorder %s15, 0
    %p42 = por %p40, %p41
    %s44 = sadd.s32 %s43, 1
    %p47 = scmp.eq.s32.totalorder %s9, 1
    %p48 = scmp.ne.s32.totalorder %s43, %s45
    %p49 = scmp.eq.s32.totalorder %s9, 0
    %p50 = por %p48, %p49
    %p51 = scmp.ne.s32.totalorder %s43, %s45
    %p52 = scmp.eq.s32.totalorder %s14, 1
    %p53 = por %p51, %p52
    %p54 = scmp.ne.s32.totalorder %s45, %s46
    %p55 = scmp.eq.s32.totalorder %s14, 0
    %p56 = por %p54, %p55
    %p57 = scmp.ne.s32.totalorder %s45, %s46
    %p58 = scmp.eq.s32.totalorder %s15, 1
    %p59 = por %p57, %p58
    %p61 = scmp.ne.s32.totalorder %s46, %s60
    %p62 = scmp.eq.s32.totalorder %s15, 0
    %p63 = por %p61, %p62
    %s65 = sadd.s32 %s64, 1
    %p68 = scmp.eq.s32.totalorder %s9, 1
    %p69 = scmp.ne.s32.totalorder %s64, %s66
    %p70 = scmp.eq.s32.totalorder %s9, 0
    %p71 = por %p69, %p70
    %p72 = scmp.ne.s32.totalorder %s64, %s66
    %p73 = scmp.eq.s32.totalorder %s14, 1
    %p74 = por %p72, %p73
    %p75 = scmp.ne.s32.totalorder %s66, %s67
    %p76 = scmp.eq.s32.totalorder %s14, 0
    %p77 = por %p75, %p76
    %p78 = scmp.ne.s32.totalorder %s66, %s67
    %p79 = scmp.eq.s32.totalorder %s15, 1
    %p80 = por %p78, %p79
    %p82 = scmp.ne.s32.totalorder %s67, %s81
    %p83 = scmp.eq.s32.totalorder %s15, 0
    %p84 = por %p82, %p83
    %s85 = ssub.s32 %s9, %s16
    %p86 = scmp.eq.s32.totalorder %s85, 0
    %s88 = sadd.s32 %s87, 1
    %s89 = scalar_select %p86, %s87, %s88
    %p92 = pneg %p86
    %p93 = scmp.eq.s32.totalorder %s9, 1
    %p94 = por %p92, %p93
    %p95 = scmp.ne.s32.totalorder %s87, %s90
    %p96 = scmp.eq.s32.totalorder %s9, 0
    %p97 = por %p95, %p96
    %p98 = scmp.ne.s32.totalorder %s87, %s90
    %p99 = scmp.eq.s32.totalorder %s14, 1
    %p100 = por %p98, %p99
    %p101 = scmp.ne.s32.totalorder %s90, %s91
    %p102 = scmp.eq.s32.totalorder %s14, 0
    %p103 = por %p101, %p102
    %p104 = scmp.ne.s32.totalorder %s90, %s91
    %p105 = scmp.eq.s32.totalorder %s15, 1
    %p106 = por %p104, %p105
    %p108 = scmp.ne.s32.totalorder %s91, %s107
    %p109 = scmp.eq.s32.totalorder %s15, 0
    %p110 = por %p108, %p109
    %p111 = scmp.le.s32.totalorder 1, %s9
    %p112 = scmp.lt.s32.totalorder %s9, 3
    %p113 = pnand %p111, %p112
    %p114 = pneg %p113
    // Predicated region
    $region9: #{resnet_block.1} parent=5 // pred_check
      _
    $region10: #{resnet_block.1} parent=5 // pred_check_branch
      %116 = sbr.rel (%p113) target = $region12
    $region11: #{resnet_block.1} parent=5 // pred_region
      %s117 = ssub.s32 %s9, 1
      // Predicated region
      $region13: #{resnet_block.1} parent=11 // pred_check
        %p118 = pneg %p56
      $region14: #{resnet_block.1} parent=11 // pred_check_branch
        %120 = sbr.rel (%p118) target = $region16
      $region15: #{resnet_block.1} parent=11 // pred_region
        _
      $region16: #{resnet_block.1} parent=11 // pred_fallthru
        _
      // Predicated region
      $region17: #{resnet_block.1} parent=11 // pred_check
        %p121 = pneg %p77
      $region18: #{resnet_block.1} parent=11 // pred_check_branch
        %123 = sbr.rel (%p121) target = $region20
      $region19: #{resnet_block.1} parent=11 // pred_region
        _
      $region20: #{resnet_block.1} parent=11 // pred_fallthru
        _
    $region12: #{resnet_block.1} parent=5 // pred_fallthru
      _
    %p124 = scmp.lt.s32.totalorder %s9, 2
    // Predicated region
    $region21: #{resnet_block.1} parent=5 // pred_check
      %p125 = pneg %p124
    $region22: #{resnet_block.1} parent=5 // pred_check_branch
      %127 = sbr.rel (%p125) target = $region24
    $region23: #{resnet_block.1} parent=5 // pred_region
      // Predicated region
      $region25: #{resnet_block.1} parent=23 // pred_check
        %p128 = pneg %p29
      $region26: #{resnet_block.1} parent=23 // pred_check_branch
        %130 = sbr.rel (%p128) target = $region28
      $region27: #{resnet_block.1} parent=23 // pred_region
        %p131 = scmp.lt.s32.totalorder %s9, 1
        %s132 = scalar_select %p131, %s9, 1
        %s133 = smul.addr %s132, 2
        %s134 = smul.addr %s133, 8
        %s135 = scalar_lea.vmem %s0, %s134
      $region28: #{resnet_block.1} parent=23 // pred_fallthru
        _
    $region24: #{resnet_block.1} parent=5 // pred_fallthru
      _
    %p136 = scmp.le.s32.totalorder 1, %s9
    %p137 = scmp.lt.s32.totalorder %s9, 3
    %p138 = pnand %p136, %p137
    %p139 = pneg %p138
    // Predicated region
    $region29: #{resnet_block.1} parent=5 // pred_check
      _
    $region30: #{resnet_block.1} parent=5 // pred_check_branch
      %141 = sbr.rel (%p138) target = $region32
    $region31: #{resnet_block.1} parent=5 // pred_region
      %s142 = ssub.s32 %s9, 1
      %p143 = scmp.lt.s32.totalorder %s14, 1
      %s144 = scalar_select %p143, %s14, 1
      %s145 = smul.addr %s144, 2
      %s146 = smul.addr %s145, 8
      %s147 = scalar_lea.vmem %s0, %s146
      %p148 = pneg %p35
      %p149 = pneg %p32
      %p150 = pneg %p56
      %p151 = pneg %p53
      %p152 = pneg %p77
      %p153 = pneg %p74
      %p154 = pneg %p103
      %p155 = pneg %p100
      %p156 = scmp.lt.s32.totalorder %s14, 1
      %s157 = scalar_select %p156, %s14, 1
      %s158 = smul.addr %s157, 2
      %s159 = smul.addr %s158, 8
      %s160 = scalar_lea.vmem %s3, %s159
      %p161 = scmp.lt.s32.totalorder %s14, 1
      %s162 = scalar_select %p161, %s14, 1
      %s163 = smul.addr %s162, 2
      %s164 = smul.addr %s163, 8
      %s165 = scalar_lea.vmem %s0, %s164
      %p166 = scmp.lt.s32.totalorder %s14, 1
      %s167 = scalar_select %p166, %s14, 1
      %s168 = smul.addr %s167, 2
      %s169 = smul.addr %s168, 8
      %s170 = scalar_lea.vmem %s3, %s169
      %v172 = vlaneseq
      %v173 = vand.u32 %v172, 127
      %v174 = vadd.s32 %v173, 128
      %vm175 = vcmp.lt.s32.totalorder %v173, 0
      %v176 = vsub.s32 0, %v173
      %v177 = vsel %vm175, %v176, %v173
      %v178 = vshrl.u32 %v177, 4
      %v179 = vand.u32 %v177, 15
      %v180 = vsub.s32 0, %v179
      %v181 = vsel %vm175, %v180, %v179
      %vm182 = vcmp.lt.s32.totalorder %v174, 0
      %v183 = vsub.s32 0, %v174
      %v184 = vsel %vm182, %v183, %v174
      %v185 = vshrl.u32 %v184, 4
      %v186 = vand.u32 %v184, 15
      %v187 = vsub.s32 0, %v186
      %v188 = vsel %vm182, %v187, %v186
      %vm189 = vcmp.ne.s32.totalorder %v181, 0
      %vm190 = vcmp.ne.s32.totalorder %v188, 0
      %vm191 = vcmp.lt.s32.totalorder %v181, 0
      %vm192 = vcmp.lt.s32.totalorder %v188, 0
      %vm193 = vmand %vm191, %vm189
      %vm194 = vmand %vm192, %vm190
      %v195 = vadd.s32 %v181, 16
      %v196 = vadd.s32 %v188, 16
      %v197 = vsel %vm193, %v195, %v181
      %v198 = vsel %vm194, %v196, %v188
      %v199 = vld [vmem:[%s1] sm:$0xf]
      %v200 = vld [vmem:[%s2] sm:$0xf]
      %v201 = vld [vmem:[%s165] sm:$0xff]
      %v202 = vld [vmem:[%s165 + $0x8] sm:$0xff]
      %204 = vrot.lane.b32.xlu0 %v201, 113
      %v205 = vpop.permute.xlu0 %204
      %208 = vrot.lane.b32.xlu0 %v201, 17
      %v209 = vpop.permute.xlu0 %208
      %210 = vrot.lane.b32.xlu0 %v202, 17
      %v211 = vpop.permute.xlu0 %210
      %vm212 = vcmask 138240
      %v213 = vsel %vm212, %v209, %v211
      %217 = vrot.lane.b32.xlu0 %v202, 49
      %v218 = vpop.permute.xlu0 %217
      %vm220 = vcmask 7168
      %v221 = vsel %vm220, 0.0, %v205
      %v222 = vsel %vm212, %v221, %v209
      %v223 = vsel %vm212, %v211, %v218
      %vm224 = vcmask 269312
      %v225 = vsel %vm224, %v223, 0.0
      %vm226 = vcmp.eq.s32.totalorder %v197, 0
      %vm227 = vcmp.eq.s32.totalorder %v198, 0
      %230 = vrot.lane.b32.xlu0 %v222, 126
      %v231 = vpop.permute.xlu0 %230
      %232 = vrot.lane.b32.xlu0 %v213, 126
      %v233 = vpop.permute.xlu0 %232
      %234 = vrot.lane.b32.xlu0 %v225, 126
      %v235 = vpop.permute.xlu0 %234
      %vm236 = vcmask 1031168
      %v237 = vsel %vm236, %v231, %v233
      %v238 = vsel %vm236, %v233, %v235
      %v241 = vsel %vm226, %v237, %v222
      %v242 = vsel %vm227, %v238, %v213
      %vm243 = vcmp.eq.s32.totalorder %v197, 15
      %vm244 = vcmp.eq.s32.totalorder %v198, 15
      %v245 = vsel %vm243, %v222, %v237
      %v246 = vsel %vm244, %v213, %v238
      %247 = vrot.lane.b32.xlu0 %v222, 110
      %v248 = vpop.permute.xlu0 %247
      %249 = vrot.lane.b32.xlu0 %v213, 110
      %v250 = vpop.permute.xlu0 %249
      %251 = vrot.lane.b32.xlu0 %v225, 110
      %v252 = vpop.permute.xlu0 %251
      %vm253 = vcmask 900096
      %v254 = vsel %vm253, %v248, %v250
      %v255 = vsel %vm253, %v250, %v252
      %258 = vrot.lane.b32.xlu0 %v222, 112
      %v259 = vpop.permute.xlu0 %258
      %260 = vrot.lane.b32.xlu0 %v213, 112
      %v261 = vpop.permute.xlu0 %260
      %262 = vrot.lane.b32.xlu0 %v225, 112
      %v263 = vpop.permute.xlu0 %262
      %vm264 = vcmask 916480
      %v265 = vsel %vm264, %v259, %v261
      %v266 = vsel %vm264, %v261, %v263
      %v269 = vsel %vm226, %v254, %v265
      %v270 = vsel %vm227, %v255, %v266
      %v271 = vsel %vm243, %v265, %v254
      %v272 = vsel %vm244, %v266, %v255
      %273 = vrot.lane.b32.xlu0 %v222, 94
      %v274 = vpop.permute.xlu0 %273
      %275 = vrot.lane.b32.xlu0 %v213, 94
      %v276 = vpop.permute.xlu0 %275
      %277 = vrot.lane.b32.xlu0 %v225, 94
      %v278 = vpop.permute.xlu0 %277
      %vm279 = vcmask 769024
      %v280 = vsel %vm279, %v274, %v276
      %v281 = vsel %vm279, %v276, %v278
      %284 = vrot.lane.b32.xlu0 %v222, 96
      %v285 = vpop.permute.xlu0 %284
      %286 = vrot.lane.b32.xlu0 %v213, 96
      %v287 = vpop.permute.xlu0 %286
      %288 = vrot.lane.b32.xlu0 %v225, 96
      %v289 = vpop.permute.xlu0 %288
      %vm290 = vcmask 785408
      %v291 = vsel %vm290, %v285, %v287
      %v292 = vsel %vm290, %v287, %v289
      %v295 = vsel %vm226, %v280, %v291
      %v296 = vsel %vm227, %v281, %v292
      %v297 = vsel %vm243, %v291, %v280
      %v298 = vsel %vm244, %v292, %v281
      %299 = vrot.lane.b32.xlu0 %v222, 127
      %v300 = vpop.permute.xlu0 %299
      %301 = vrot.lane.b32.xlu0 %v213, 127
      %v302 = vpop.permute.xlu0 %301
      %303 = vrot.lane.b32.xlu0 %v225, 127
      %v304 = vpop.permute.xlu0 %303
      %vm305 = vcmask 1039360
      %v306 = vsel %vm305, %v300, %v302
      %v307 = vsel %vm305, %v302, %v304
      %310 = vrot.lane.b32.xlu0 %v222, 111
      %v311 = vpop.permute.xlu0 %310
      %312 = vrot.lane.b32.xlu0 %v213, 111
      %v313 = vpop.permute.xlu0 %312
      %314 = vrot.lane.b32.xlu0 %v225, 111
      %v315 = vpop.permute.xlu0 %314
      %vm316 = vcmask 908288
      %v317 = vsel %vm316, %v311, %v313
      %v318 = vsel %vm316, %v313, %v315
      %321 = vrot.lane.b32.xlu0 %v222, 95
      %v322 = vpop.permute.xlu0 %321
      %323 = vrot.lane.b32.xlu0 %v213, 95
      %v324 = vpop.permute.xlu0 %323
      %325 = vrot.lane.b32.xlu0 %v225, 95
      %v326 = vpop.permute.xlu0 %325
      %vm327 = vcmask 777216
      %v328 = vsel %vm327, %v322, %v324
      %v329 = vsel %vm327, %v324, %v326
      %v332 = vpack.c.bf16 %v306, %v241
      %v333 = vpack.c.bf16 %v307, %v242
      %v334 = vpack.c.bf16 %v269, %v245
      %v335 = vpack.c.bf16 %v270, %v246
      %v336 = vpack.c.bf16 %v271, %v317
      %v337 = vpack.c.bf16 %v272, %v318
      %v338 = vpack.c.bf16 %v328, %v295
      %v339 = vpack.c.bf16 %v329, %v296
      %v340 = vpack.c.bf16 %v297, %v297
      %v341 = vpack.c.bf16 %v298, %v298
      %vm342 = vcmask 588800
      %v344 = vsel %vm342, %v199, 0
      %vm346 = vcmask 1043456
      %v348 = vsel %vm346, %v340, 0
      %v351 = vsel %vm346, %v341, 0
      %353 = vmatprep.subr.bf16.mxu0 %v333
      %354 = vmatpush1.bf16.msra.mxu0 %v332
      %355 = vmatprep.subr.bf16.mxu0 %v335
      %356 = vmatpush1.bf16.msra.mxu0 %v334
      %357 = vmatprep.subr.bf16.mxu0 %v337
      %358 = vmatpush1.bf16.msra.mxu0 %v336
      %359 = vmatprep.subr.bf16.mxu0 %v339
      %360 = vmatpush1.bf16.msra.mxu0 %v338
      %361 = vmatprep.subr.bf16.mxu0 %v351
      %362 = vmatpush1.bf16.msra.mxu0 %v348
      %363 = vmatprep.subr.bf16.mxu0 0
      %364 = vmatpush1.bf16.msra.mxu0 0
      %365 = vmatprep.subr.bf16.mxu0 0
      %366 = vmatpush1.bf16.msra.mxu0 0
      %367 = vmatprep.subr.bf16.mxu0 0
      %368 = vmatpush1.bf16.msra.mxu0 0
      %369 = vmatprep.subr.bf16.mxu0 0
      %370 = vmatpush1.bf16.msra.mxu0 0
      %371 = vmatprep.subr.bf16.mxu0 0
      %372 = vmatpush1.bf16.msra.mxu0 0
      %373 = vmatprep.subr.bf16.mxu0 0
      %374 = vmatpush1.bf16.msra.mxu0 0
      %375 = vmatprep.subr.bf16.mxu0 0
      %376 = vmatpush1.bf16.msra.mxu0 0
      %377 = vmatprep.subr.bf16.mxu0 0
      %378 = vmatpush1.bf16.msra.mxu0 0
      %379 = vmatprep.subr.bf16.mxu0 0
      %380 = vmatpush1.bf16.msra.mxu0 0
      %381 = vmatprep.subr.bf16.mxu0 0
      %382 = vmatpush1.bf16.msra.mxu0 0
      %383 = vmatprep.subr.bf16.mxu0 0
      %384 = vmatpush1.bf16.msra.mxu0 0
      %385 = vmatprep.mubr.bf16.mxu0 0
      %386 = vmatmul.mubr.bf16.gmra.mrb[0].mxu0 %v344
      %v387 = vpop.f32.mrb[0].mxu0
      %v388 = vadd.f32 0.0, %v387
      %v389 = vpop.f32.mrb[0].mxu0
      %v390 = vadd.f32 0.0, %v389
      %v391 = vpop.f32.mrb[0].mxu0
      %v392 = vpop.f32.mrb[0].mxu0
      %393 = vdwg.mxu0
      %v394 = vadd.f32 %v388, %v390
      %395 = vadd.xlane.f32.xlu0 %v394
      %v396 = vpop.xlane.xlu0 %395
      %v397 = vrcp.pop 256.0
      %v398 = vmul.f32 %v396, %v397
      %v399 = vsub.f32 %v388, %v398
      %v400 = vsub.f32 %v390, %v398
      %v401 = vmul.f32 %v399, %v399
      %v402 = vmul.f32 %v400, %v400
      %v403 = vadd.f32 %v401, %v402
      %404 = vadd.xlane.f32.xlu0 %v403
      %v405 = vpop.xlane.xlu0 %404
      %v406 = vmul.f32 %v405, %v397
      %v407 = vadd.f32 %v406, 1e-05
      %v408 = vrsqrt.pop %v407
      %v409 = vmul.f32 %v399, %v408
      %v410 = vmul.f32 %v400, %v408
      %v411 = vmax.f32 %v409, 0.0
      %v412 = vmax.f32 %v410, 0.0
      %414 = vrot.lane.b32.xlu0 %v411, 113
      %v415 = vpop.permute.xlu0 %414
      %418 = vrot.lane.b32.xlu0 %v411, 17
      %v419 = vpop.permute.xlu0 %418
      %420 = vrot.lane.b32.xlu0 %v412, 17
      %v421 = vpop.permute.xlu0 %420
      %v422 = vsel %vm212, %v419, %v421
      %426 = vrot.lane.b32.xlu0 %v412, 49
      %v427 = vpop.permute.xlu0 %426
      %v429 = vsel %vm220, 0.0, %v415
      %v430 = vsel %vm212, %v429, %v419
      %v431 = vsel %vm212, %v421, %v427
      %v432 = vsel %vm224, %v431, 0.0
      %435 = vrot.lane.b32.xlu0 %v430, 126
      %v436 = vpop.permute.xlu0 %435
      %437 = vrot.lane.b32.xlu0 %v422, 126
      %v438 = vpop.permute.xlu0 %437
      %439 = vrot.lane.b32.xlu0 %v432, 126
      %v440 = vpop.permute.xlu0 %439
      %v441 = vsel %vm236, %v436, %v438
      %v442 = vsel %vm236, %v438, %v440
      %v445 = vsel %vm226, %v441, %v430
      %v446 = vsel %vm227, %v442, %v422
      %v447 = vsel %vm243, %v430, %v441
      %v448 = vsel %vm244, %v422, %v442
      %449 = vrot.lane.b32.xlu0 %v430, 110
      %v450 = vpop.permute.xlu0 %449
      %451 = vrot.lane.b32.xlu0 %v422, 110
      %v452 = vpop.permute.xlu0 %451
      %453 = vrot.lane.b32.xlu0 %v432, 110
      %v454 = vpop.permute.xlu0 %453
      %v455 = vsel %vm253, %v450, %v452
      %v456 = vsel %vm253, %v452, %v454
      %459 = vrot.lane.b32.xlu0 %v430, 112
      %v460 = vpop.permute.xlu0 %459
      %461 = vrot.lane.b32.xlu0 %v422, 112
      %v462 = vpop.permute.xlu0 %461
      %463 = vrot.lane.b32.xlu0 %v432, 112
      %v464 = vpop.permute.xlu0 %463
      %v465 = vsel %vm264, %v460, %v462
      %v466 = vsel %vm264, %v462, %v464
      %v469 = vsel %vm226, %v455, %v465
      %v470 = vsel %vm227, %v456, %v466
      %v471 = vsel %vm243, %v465, %v455
      %v472 = vsel %vm244, %v466, %v456
      %473 = vrot.lane.b32.xlu0 %v430, 94
      %v474 = vpop.permute.xlu0 %473
      %475 = vrot.lane.b32.xlu0 %v422, 94
      %v476 = vpop.permute.xlu0 %475
      %477 = vrot.lane.b32.xlu0 %v432, 94
      %v478 = vpop.permute.xlu0 %477
      %v479 = vsel %vm279, %v474, %v476
      %v480 = vsel %vm279, %v476, %v478
      %483 = vrot.lane.b32.xlu0 %v430, 96
      %v484 = vpop.permute.xlu0 %483
      %485 = vrot.lane.b32.xlu0 %v422, 96
      %v486 = vpop.permute.xlu0 %485
      %487 = vrot.lane.b32.xlu0 %v432, 96
      %v488 = vpop.permute.xlu0 %487
      %v489 = vsel %vm290, %v484, %v486
      %v490 = vsel %vm290, %v486, %v488
      %v493 = vsel %vm226, %v479, %v489
      %v494 = vsel %vm227, %v480, %v490
      %v495 = vsel %vm243, %v489, %v479
      %v496 = vsel %vm244, %v490, %v480
      %497 = vrot.lane.b32.xlu0 %v430, 127
      %v498 = vpop.permute.xlu0 %497
      %499 = vrot.lane.b32.xlu0 %v422, 127
      %v500 = vpop.permute.xlu0 %499
      %501 = vrot.lane.b32.xlu0 %v432, 127
      %v502 = vpop.permute.xlu0 %501
      %v503 = vsel %vm305, %v498, %v500
      %v504 = vsel %vm305, %v500, %v502
      %507 = vrot.lane.b32.xlu0 %v430, 111
      %v508 = vpop.permute.xlu0 %507
      %509 = vrot.lane.b32.xlu0 %v422, 111
      %v510 = vpop.permute.xlu0 %509
      %511 = vrot.lane.b32.xlu0 %v432, 111
      %v512 = vpop.permute.xlu0 %511
      %v513 = vsel %vm316, %v508, %v510
      %v514 = vsel %vm316, %v510, %v512
      %517 = vrot.lane.b32.xlu0 %v430, 95
      %v518 = vpop.permute.xlu0 %517
      %519 = vrot.lane.b32.xlu0 %v422, 95
      %v520 = vpop.permute.xlu0 %519
      %521 = vrot.lane.b32.xlu0 %v432, 95
      %v522 = vpop.permute.xlu0 %521
      %v523 = vsel %vm327, %v518, %v520
      %v524 = vsel %vm327, %v520, %v522
      %v527 = vpack.c.bf16 %v503, %v445
      %v528 = vpack.c.bf16 %v504, %v446
      %v529 = vpack.c.bf16 %v469, %v447
      %v530 = vpack.c.bf16 %v470, %v448
      %v531 = vpack.c.bf16 %v471, %v513
      %v532 = vpack.c.bf16 %v472, %v514
      %v533 = vpack.c.bf16 %v523, %v493
      %v534 = vpack.c.bf16 %v524, %v494
      %v535 = vpack.c.bf16 %v495, %v495
      %v536 = vpack.c.bf16 %v496, %v496
      %v538 = vsel %vm342, %v200, 0
      %v541 = vsel %vm346, %v535, 0
      %v544 = vsel %vm346, %v536, 0
      %546 = vmatprep.subr.bf16.mxu0 %v528
      %547 = vmatpush1.bf16.msra.mxu0 %v527
      %548 = vmatprep.subr.bf16.mxu0 %v530
      %549 = vmatpush1.bf16.msra.mxu0 %v529
      %550 = vmatprep.subr.bf16.mxu0 %v532
      %551 = vmatpush1.bf16.msra.mxu0 %v531
      %552 = vmatprep.subr.bf16.mxu0 %v534
      %553 = vmatpush1.bf16.msra.mxu0 %v533
      %554 = vmatprep.subr.bf16.mxu0 %v544
      %555 = vmatpush1.bf16.msra.mxu0 %v541
      %556 = vmatprep.subr.bf16.mxu0 0
      %557 = vmatpush1.bf16.msra.mxu0 0
      %558 = vmatprep.subr.bf16.mxu0 0
      %559 = vmatpush1.bf16.msra.mxu0 0
      %560 = vmatprep.subr.bf16.mxu0 0
      %561 = vmatpush1.bf16.msra.mxu0 0
      %562 = vmatprep.subr.bf16.mxu0 0
      %563 = vmatpush1.bf16.msra.mxu0 0
      %564 = vmatprep.subr.bf16.mxu0 0
      %565 = vmatpush1.bf16.msra.mxu0 0
      %566 = vmatprep.subr.bf16.mxu0 0
      %567 = vmatpush1.bf16.msra.mxu0 0
      %568 = vmatprep.subr.bf16.mxu0 0
      %569 = vmatpush1.bf16.msra.mxu0 0
      %570 = vmatprep.subr.bf16.mxu0 0
      %571 = vmatpush1.bf16.msra.mxu0 0
      %572 = vmatprep.subr.bf16.mxu0 0
      %573 = vmatpush1.bf16.msra.mxu0 0
      %574 = vmatprep.subr.bf16.mxu0 0
      %575 = vmatpush1.bf16.msra.mxu0 0
      %576 = vmatprep.subr.bf16.mxu0 0
      %577 = vmatpush1.bf16.msra.mxu0 0
      %578 = vmatprep.mubr.bf16.mxu0 0
      %579 = vmatmul.mubr.bf16.gmra.mrb[0].mxu0 %v538
      %v580 = vpop.f32.mrb[0].mxu0
      %v581 = vadd.f32 0.0, %v580
      %v582 = vpop.f32.mrb[0].mxu0
      %v583 = vadd.f32 0.0, %v582
      %v584 = vpop.f32.mrb[0].mxu0
      %v585 = vpop.f32.mrb[0].mxu0
      %586 = vdwg.mxu0
      %v587 = vadd.f32 %v581, %v583
      %588 = vadd.xlane.f32.xlu0 %v587
      %v589 = vpop.xlane.xlu0 %588
      %v590 = vmul.f32 %v589, %v397
      %v591 = vsub.f32 %v581, %v590
      %v592 = vsub.f32 %v583, %v590
      %v593 = vmul.f32 %v591, %v591
      %v594 = vmul.f32 %v592, %v592
      %v595 = vadd.f32 %v593, %v594
      %596 = vadd.xlane.f32.xlu0 %v595
      %v597 = vpop.xlane.xlu0 %596
      %v598 = vmul.f32 %v597, %v397
      %v599 = vadd.f32 %v598, 1e-05
      %v600 = vrsqrt.pop %v599
      %v601 = vmul.f32 %v591, %v600
      %v602 = vmul.f32 %v592, %v600
      %v603 = vadd.f32 %v201, %v601
      %v604 = vadd.f32 %v202, %v602
      %605 = vst [vmem:[%s170] sm:$0xff] %v603
      %606 = vst [vmem:[%s170 + $0x8] sm:$0xff] %v604
      %p607 = scmp.lt.s32.totalorder %s14, 1
      %s608 = scalar_select %p607, %s14, 1
      %s609 = smul.addr %s608, 2
      %s610 = smul.addr %s609, 8
      %s611 = scalar_lea.vmem %s3, %s610
      // Predicated region
      $region33: #{resnet_block.1} parent=31 // pred_check
        %p612 = pneg %p100
      $region34: #{resnet_block.1} parent=31 // pred_check_branch
        %614 = sbr.rel (%p612) target = $region36
      $region35: #{resnet_block.1} parent=31 // pred_region
        _
      $region36: #{resnet_block.1} parent=31 // pred_fallthru
        _
    $region32: #{resnet_block.1} parent=5 // pred_fallthru
      _
    %p615 = scmp.le.s32.totalorder 2, %s9
    // Predicated region
    $region37: #{resnet_block.1} parent=5 // pred_check
      %p616 = pneg %p615
    $region38: #{resnet_block.1} parent=5 // pred_check_branch
      %618 = sbr.rel (%p616) target = $region40
    $region39: #{resnet_block.1} parent=5 // pred_region
      %s619 = ssub.s32 %s9, 2
      // Predicated region
      $region41: #{resnet_block.1} parent=39 // pred_check
        %p620 = pneg %p106
      $region42: #{resnet_block.1} parent=39 // pred_check_branch
        %622 = sbr.rel (%p620) target = $region44
      $region43: #{resnet_block.1} parent=39 // pred_region
        %p623 = scmp.lt.s32.totalorder %s15, 1
        %s624 = scalar_select %p623, %s15, 1
        %s625 = smul.addr %s624, 2
        %s626 = smul.addr %s625, 8
        %s627 = scalar_lea.vmem %s3, %s626
      $region44: #{resnet_block.1} parent=39 // pred_fallthru
        _
    $region40: #{resnet_block.1} parent=5 // pred_fallthru
      _
  $region6: #{resnet_block.1} parent=0 // loop_footer
    %s13 = sadd.s32 1, %s9
  $region7: #{resnet_block.1} parent=0 // loop_footer_branch
    %8 = sbr.rel target = $region3
  $region8: #{resnet_block.1} parent=0 // loop_exit
    _

</llo_original>
